<compile_context>
chip_gen: v7x
topology: tpu7x:2x2x1
jax: 0.10.0
libtpu: 0.0.40
codegen_flags: <defaults>
</compile_context>

<pallas_src>
import jax
import jax.numpy as jnp
from jax.experimental import pallas as pl
from jax.experimental.pallas import tpu as pltpu


def _sort_columns_ascending(temp, n_rows):
    """Ascending sort along axis 0 (independently per column), vectorized.

    Odd-even transposition sort: n_rows passes, each pass = 2 sublane rolls (XLU)
    + min/max + 2 selects (VPU) on whole tiles.  Everything stays in-register.
    """
    row = jax.lax.broadcasted_iota(jnp.int32, temp.shape, 0)
    # Hoisted parity masks (only two distinct parities across all passes).
    low = [((row & 1) == p) & (row < n_rows - 1) for p in (0, 1)]   # pair start i
    up = [((row & 1) == (1 - p)) & (row >= 1) for p in (0, 1)]      # pair end i+1
    for p in range(n_rows):
        parity = p & 1
        nxt = pltpu.roll(temp, shift=n_rows - 1, axis=0)   # row i sees temp[(i+1) % n]
        prv = pltpu.roll(temp, shift=1, axis=0)            # row i sees temp[(i-1) % n]
        temp = jnp.where(
            low[parity], jnp.minimum(temp, nxt),
            jnp.where(up[parity], jnp.maximum(temp, prv), temp))
    return temp


def _make_kernel(n_earthquake, tau_max, L, sort_out):
    if L > 0:
        def kernel(z_ref, loc_ref, t_ref, w1z_ref, w1l_ref, b1_ref,
                   w2_ref, b2_ref, o_ref):
            # Parameter clamps (clamp-of-concat == concat-of-clamps).
            loc = jnp.clip(loc_ref[...], 0.0, 1.0)                 # (n_e, 3)
            t_eq = jnp.clip(t_ref[...], 0.0, tau_max)              # (n_e, 1)
            zc = jnp.clip(z_ref[...], 0.0, 1.0)                    # (L, 1)

            # z-contribution to layer 1 computed once (same for every earthquake row);
            # folds the b1 bias in as well.  Xin @ W1 == z @ W1[:L] + loc @ W1[L:].
            zb = jnp.sum(w1z_ref[...] * zc, axis=0, keepdims=True) + b1_ref[...]  # (1, H)
            h = jnp.maximum(
                jnp.dot(loc, w1l_ref[...], preferred_element_type=jnp.float32) + zb,
                0.0)                                               # (n_e, H)

            # Layer 2 + fused (b2 + origin time) broadcast add. temp: (n_e, N_pad)
            temp = (jnp.dot(h, w2_ref[...], preferred_element_type=jnp.float32)
                    + (t_eq + b2_ref[...]))

            if sort_out and n_earthquake > 1:
                temp = _sort_columns_ascending(temp, n_earthquake)
            o_ref[...] = temp                                      # single full-tile store
        return kernel

    def kernel(loc_ref, t_ref, w1_ref, b1_ref, w2_ref, b2_ref, o_ref):
        loc = jnp.clip(loc_ref[...], 0.0, 1.0)
        t_eq = jnp.clip(t_ref[...], 0.0, tau_max)
        h = jnp.maximum(
            jnp.dot(loc, w1_ref[...], preferred_element_type=jnp.float32)
            + b1_ref[...], 0.0)
        temp = (jnp.dot(h, w2_ref[...], preferred_element_type=jnp.float32)
                + (t_eq + b2_ref[...]))
        if sort_out and n_earthquake > 1:
            temp = _sort_columns_ascending(temp, n_earthquake)
        o_ref[...] = temp
    return kernel


def assignment_model_forward(loc_earthquake, time_earthquake, z,
                             w1, b1, w2, b2,
                             *, n_station, tau_max, L, sort_out=True):
    """Functional equivalent of AssignmentModel.forward()."""
    n_e = loc_earthquake.shape[0]
    n_pad = max(128, ((n_station + 127) // 128) * 128)   # lane-dense station axis

    # One-time layout prep of the frozen travel-time weights (lane-dense last dim).
    w2p = jnp.pad(w2.astype(jnp.float32), ((0, 0), (0, n_pad - n_station)))
    b2p = jnp.pad(b2.reshape(1, -1).astype(jnp.float32),
                  ((0, 0), (0, n_pad - n_station)))
    b1r = b1.reshape(1, -1).astype(jnp.float32)
    t_col = time_earthquake.reshape(n_e, 1).astype(jnp.float32)

    kernel = _make_kernel(n_e, float(tau_max), L, sort_out)

    if L > 0:
        w1z = w1[:L].astype(jnp.float32)   # rows of W1 multiplying the z columns
        w1l = w1[L:].astype(jnp.float32)   # rows of W1 multiplying loc_earthquake
        args = (z.reshape(L, 1).astype(jnp.float32),
                loc_earthquake.astype(jnp.float32), t_col,
                w1z, w1l, b1r, w2p, b2p)
    else:
        args = (loc_earthquake.astype(jnp.float32), t_col,
                w1.astype(jnp.float32), b1r, w2p, b2p)

    out_padded = pl.pallas_call(
        kernel,
        out_shape=jax.ShapeDtypeStruct((n_e, n_pad), jnp.float32),
        in_specs=[pl.BlockSpec(memory_space=pltpu.MemorySpace.VMEM)] * len(args),
        out_specs=pl.BlockSpec(memory_space=pltpu.MemorySpace.VMEM),
    )(*args)
    # Slice off the lane padding (one-time, outside the kernel).
    return out_padded[:, :n_station]


if __name__ == "__main__":
    # Small shapes consistent with the module's __init__.
    n_earthquake, n_station, L = 8, 16, 4
    tau_max, hidden = 10.0, 32
    in_dim = L + 3

    key = jax.random.PRNGKey(0)
    k = jax.random.split(key, 7)
    # Module parameters (np.random.rand -> uniform [0,1); time scaled by tau_max).
    loc_earthquake = jax.random.uniform(k[0], (n_earthquake, 3), jnp.float32)
    time_earthquake = jax.random.uniform(k[1], (n_earthquake,), jnp.float32) * tau_max
    z = jax.random.uniform(k[2], (L,), jnp.float32)
    # Frozen travel-time MLP weights (deterministic stand-in for model_traveltime).
    w1 = jax.random.normal(k[3], (in_dim, hidden), jnp.float32) * 0.5
    b1 = jax.random.normal(k[4], (hidden,), jnp.float32) * 0.1
    w2 = jax.random.normal(k[5], (hidden, n_station), jnp.float32) * 0.5
    b2 = jax.random.normal(k[6], (n_station,), jnp.float32) * 0.1

    out = assignment_model_forward(
        loc_earthquake, time_earthquake, z, w1, b1, w2, b2,
        n_station=n_station, tau_max=tau_max, L=L, sort_out=True,
    )
    out = jax.block_until_ready(out)

    # Pure-JAX reference (mirrors the PyTorch forward).
    z_c = jnp.clip(z, 0.0, 1.0)
    loc_c = jnp.clip(loc_earthquake, 0.0, 1.0)
    t_c = jnp.clip(time_earthquake, 0.0, tau_max)
    xin_ref = jnp.concatenate(
        [jnp.tile(z_c[None, :], (n_earthquake, 1)), loc_c], axis=1)
    h_ref = jnp.maximum(xin_ref @ w1 + b1, 0.0)
    ref = h_ref @ w2 + b2 + t_c[:, None]
    ref = jnp.sort(ref, axis=0)

    assert out.shape == (n_earthquake, n_station)
    assert jnp.allclose(out, ref, atol=1e-4, rtol=1e-4), "kernel/reference mismatch"
    print("KERNEL_OK")
</pallas_src>

<mosaic_0001>
module attributes {stable_mosaic.version = 11 : i64} {
  func.func @kernel(%arg0: memref<4x1xf32, #tpu.memory_space<vmem>>, %arg1: memref<8x3xf32, #tpu.memory_space<vmem>>, %arg2: memref<8x1xf32, #tpu.memory_space<vmem>>, %arg3: memref<4x32xf32, #tpu.memory_space<vmem>>, %arg4: memref<3x32xf32, #tpu.memory_space<vmem>>, %arg5: memref<1x32xf32, #tpu.memory_space<vmem>>, %arg6: memref<32x128xf32, #tpu.memory_space<vmem>>, %arg7: memref<1x128xf32, #tpu.memory_space<vmem>>, %arg8: memref<8x128xf32, #tpu.memory_space<vmem>>) attributes {dimension_semantics = [], scalar_prefetch = 0 : i64, scratch_operands = 0 : i64, tpu.core_type = #tpu.core_type<tc>} {
    %c0 = arith.constant 0 : index
    %c0_0 = arith.constant 0 : index
    %0 = vector.load %arg1[%c0, %c0_0] : memref<8x3xf32, #tpu.memory_space<vmem>>, vector<8x3xf32>
    %cst = arith.constant 0.000000e+00 : f32
    %cst_1 = arith.constant 1.000000e+00 : f32
    %1 = vector.broadcast %cst : f32 to vector<8x3xf32>
    %2 = arith.maximumf %1, %0 : vector<8x3xf32>
    %3 = vector.broadcast %cst_1 : f32 to vector<8x3xf32>
    %4 = arith.minimumf %3, %2 : vector<8x3xf32>
    %c0_2 = arith.constant 0 : index
    %c0_3 = arith.constant 0 : index
    %5 = vector.load %arg2[%c0_2, %c0_3] : memref<8x1xf32, #tpu.memory_space<vmem>>, vector<8x1xf32>
    %cst_4 = arith.constant 0.000000e+00 : f32
    %cst_5 = arith.constant 1.000000e+01 : f32
    %6 = vector.broadcast %cst_4 : f32 to vector<8x1xf32>
    %7 = arith.maximumf %6, %5 : vector<8x1xf32>
    %8 = vector.broadcast %cst_5 : f32 to vector<8x1xf32>
    %9 = arith.minimumf %8, %7 : vector<8x1xf32>
    %c0_6 = arith.constant 0 : index
    %c0_7 = arith.constant 0 : index
    %10 = vector.load %arg0[%c0_6, %c0_7] : memref<4x1xf32, #tpu.memory_space<vmem>>, vector<4x1xf32>
    %cst_8 = arith.constant 0.000000e+00 : f32
    %cst_9 = arith.constant 1.000000e+00 : f32
    %11 = vector.broadcast %cst_8 : f32 to vector<4x1xf32>
    %12 = arith.maximumf %11, %10 : vector<4x1xf32>
    %13 = vector.broadcast %cst_9 : f32 to vector<4x1xf32>
    %14 = arith.minimumf %13, %12 : vector<4x1xf32>
    %c0_10 = arith.constant 0 : index
    %c0_11 = arith.constant 0 : index
    %15 = vector.load %arg3[%c0_10, %c0_11] : memref<4x32xf32, #tpu.memory_space<vmem>>, vector<4x32xf32>
    %16 = vector.broadcast %14 : vector<4x1xf32> to vector<4x32xf32>
    %17 = arith.mulf %15, %16 : vector<4x32xf32>
    %cst_12 = arith.constant dense<0.000000e+00> : vector<32xf32>
    %18 = vector.multi_reduction <add>, %17, %cst_12 [0] : vector<4x32xf32> to vector<32xf32>
    %19 = vector.shape_cast %18 : vector<32xf32> to vector<1x32xf32>
    %c0_13 = arith.constant 0 : index
    %c0_14 = arith.constant 0 : index
    %20 = vector.load %arg5[%c0_13, %c0_14] : memref<1x32xf32, #tpu.memory_space<vmem>>, vector<1x32xf32>
    %21 = arith.addf %19, %20 : vector<1x32xf32>
    %c0_15 = arith.constant 0 : index
    %c0_16 = arith.constant 0 : index
    %22 = vector.load %arg4[%c0_15, %c0_16] : memref<3x32xf32, #tpu.memory_space<vmem>>, vector<3x32xf32>
    %cst_17 = arith.constant dense<0.000000e+00> : vector<8x32xf32>
    %23 = tpu.matmul %4, %22, %cst_17 {dimension_numbers = #tpu.dot_dimension_numbers<[1], [0], [0], [1], [0, 0, 1, 1], [], []>} : vector<8x3xf32>, vector<3x32xf32>, vector<8x32xf32> -> vector<8x32xf32>
    %24 = vector.broadcast %21 : vector<1x32xf32> to vector<8x32xf32>
    %25 = arith.addf %23, %24 : vector<8x32xf32>
    %cst_18 = arith.constant 0.000000e+00 : f32
    %26 = vector.broadcast %cst_18 : f32 to vector<8x32xf32>
    %27 = arith.maximumf %25, %26 : vector<8x32xf32>
    %c0_19 = arith.constant 0 : index
    %c0_20 = arith.constant 0 : index
    %28 = vector.load %arg6[%c0_19, %c0_20] : memref<32x128xf32, #tpu.memory_space<vmem>>, vector<32x128xf32>
    %cst_21 = arith.constant dense<0.000000e+00> : vector<8x128xf32>
    %29 = tpu.matmul %27, %28, %cst_21 {dimension_numbers = #tpu.dot_dimension_numbers<[1], [0], [0], [1], [0, 0, 1, 1], [], []>} : vector<8x32xf32>, vector<32x128xf32>, vector<8x128xf32> -> vector<8x128xf32>
    %c0_22 = arith.constant 0 : index
    %c0_23 = arith.constant 0 : index
    %30 = vector.load %arg7[%c0_22, %c0_23] : memref<1x128xf32, #tpu.memory_space<vmem>>, vector<1x128xf32>
    %31 = vector.broadcast %9 : vector<8x1xf32> to vector<8x128xf32>
    %32 = vector.broadcast %30 : vector<1x128xf32> to vector<8x128xf32>
    %33 = arith.addf %31, %32 : vector<8x128xf32>
    %34 = arith.addf %29, %33 : vector<8x128xf32>
    %35 = tpu.iota {dimensions = array<i32: 0>} : vector<8x128xi32>
    %c1_i32 = arith.constant 1 : i32
    %36 = vector.broadcast %c1_i32 : i32 to vector<8x128xi32>
    %37 = arith.andi %35, %36 : vector<8x128xi32>
    %c0_i32 = arith.constant 0 : i32
    %38 = vector.broadcast %c0_i32 : i32 to vector<8x128xi32>
    %39 = arith.cmpi eq, %37, %38 : vector<8x128xi32>
    %c7_i32 = arith.constant 7 : i32
    %40 = vector.broadcast %c7_i32 : i32 to vector<8x128xi32>
    %41 = arith.cmpi slt, %35, %40 : vector<8x128xi32>
    %42 = arith.andi %39, %41 : vector<8x128xi1>
    %c1_i32_24 = arith.constant 1 : i32
    %43 = vector.broadcast %c1_i32_24 : i32 to vector<8x128xi32>
    %44 = arith.andi %35, %43 : vector<8x128xi32>
    %c1_i32_25 = arith.constant 1 : i32
    %45 = vector.broadcast %c1_i32_25 : i32 to vector<8x128xi32>
    %46 = arith.cmpi eq, %44, %45 : vector<8x128xi32>
    %c7_i32_26 = arith.constant 7 : i32
    %47 = vector.broadcast %c7_i32_26 : i32 to vector<8x128xi32>
    %48 = arith.cmpi slt, %35, %47 : vector<8x128xi32>
    %49 = arith.andi %46, %48 : vector<8x128xi1>
    %c1_i32_27 = arith.constant 1 : i32
    %50 = vector.broadcast %c1_i32_27 : i32 to vector<8x128xi32>
    %51 = arith.andi %35, %50 : vector<8x128xi32>
    %c1_i32_28 = arith.constant 1 : i32
    %52 = vector.broadcast %c1_i32_28 : i32 to vector<8x128xi32>
    %53 = arith.cmpi eq, %51, %52 : vector<8x128xi32>
    %c1_i32_29 = arith.constant 1 : i32
    %54 = vector.broadcast %c1_i32_29 : i32 to vector<8x128xi32>
    %55 = arith.cmpi sge, %35, %54 : vector<8x128xi32>
    %56 = arith.andi %53, %55 : vector<8x128xi1>
    %c1_i32_30 = arith.constant 1 : i32
    %57 = vector.broadcast %c1_i32_30 : i32 to vector<8x128xi32>
    %58 = arith.andi %35, %57 : vector<8x128xi32>
    %c0_i32_31 = arith.constant 0 : i32
    %59 = vector.broadcast %c0_i32_31 : i32 to vector<8x128xi32>
    %60 = arith.cmpi eq, %58, %59 : vector<8x128xi32>
    %c1_i32_32 = arith.constant 1 : i32
    %61 = vector.broadcast %c1_i32_32 : i32 to vector<8x128xi32>
    %62 = arith.cmpi sge, %35, %61 : vector<8x128xi32>
    %63 = arith.andi %60, %62 : vector<8x128xi1>
    %c7_i32_33 = arith.constant 7 : i32
    %64 = tpu.dynamic_rotate %34 by %c7_i32_33 dim 0 : vector<8x128xf32>, i32 -> vector<8x128xf32>
    %c1_i32_34 = arith.constant 1 : i32
    %65 = tpu.dynamic_rotate %34 by %c1_i32_34 dim 0 : vector<8x128xf32>, i32 -> vector<8x128xf32>
    %66 = arith.minimumf %34, %64 : vector<8x128xf32>
    %67 = arith.maximumf %34, %65 : vector<8x128xf32>
    %68 = arith.select %56, %67, %34 : vector<8x128xi1>, vector<8x128xf32>
    %69 = arith.select %42, %66, %68 : vector<8x128xi1>, vector<8x128xf32>
    %c7_i32_35 = arith.constant 7 : i32
    %70 = tpu.dynamic_rotate %69 by %c7_i32_35 dim 0 : vector<8x128xf32>, i32 -> vector<8x128xf32>
    %c1_i32_36 = arith.constant 1 : i32
    %71 = tpu.dynamic_rotate %69 by %c1_i32_36 dim 0 : vector<8x128xf32>, i32 -> vector<8x128xf32>
    %72 = arith.minimumf %69, %70 : vector<8x128xf32>
    %73 = arith.maximumf %69, %71 : vector<8x128xf32>
    %74 = arith.select %63, %73, %69 : vector<8x128xi1>, vector<8x128xf32>
    %75 = arith.select %49, %72, %74 : vector<8x128xi1>, vector<8x128xf32>
    %c7_i32_37 = arith.constant 7 : i32
    %76 = tpu.dynamic_rotate %75 by %c7_i32_37 dim 0 : vector<8x128xf32>, i32 -> vector<8x128xf32>
    %c1_i32_38 = arith.constant 1 : i32
    %77 = tpu.dynamic_rotate %75 by %c1_i32_38 dim 0 : vector<8x128xf32>, i32 -> vector<8x128xf32>
    %78 = arith.minimumf %75, %76 : vector<8x128xf32>
    %79 = arith.maximumf %75, %77 : vector<8x128xf32>
    %80 = arith.select %56, %79, %75 : vector<8x128xi1>, vector<8x128xf32>
    %81 = arith.select %42, %78, %80 : vector<8x128xi1>, vector<8x128xf32>
    %c7_i32_39 = arith.constant 7 : i32
    %82 = tpu.dynamic_rotate %81 by %c7_i32_39 dim 0 : vector<8x128xf32>, i32 -> vector<8x128xf32>
    %c1_i32_40 = arith.constant 1 : i32
    %83 = tpu.dynamic_rotate %81 by %c1_i32_40 dim 0 : vector<8x128xf32>, i32 -> vector<8x128xf32>
    %84 = arith.minimumf %81, %82 : vector<8x128xf32>
    %85 = arith.maximumf %81, %83 : vector<8x128xf32>
    %86 = arith.select %63, %85, %81 : vector<8x128xi1>, vector<8x128xf32>
    %87 = arith.select %49, %84, %86 : vector<8x128xi1>, vector<8x128xf32>
    %c7_i32_41 = arith.constant 7 : i32
    %88 = tpu.dynamic_rotate %87 by %c7_i32_41 dim 0 : vector<8x128xf32>, i32 -> vector<8x128xf32>
    %c1_i32_42 = arith.constant 1 : i32
    %89 = tpu.dynamic_rotate %87 by %c1_i32_42 dim 0 : vector<8x128xf32>, i32 -> vector<8x128xf32>
    %90 = arith.minimumf %87, %88 : vector<8x128xf32>
    %91 = arith.maximumf %87, %89 : vector<8x128xf32>
    %92 = arith.select %56, %91, %87 : vector<8x128xi1>, vector<8x128xf32>
    %93 = arith.select %42, %90, %92 : vector<8x128xi1>, vector<8x128xf32>
    %c7_i32_43 = arith.constant 7 : i32
    %94 = tpu.dynamic_rotate %93 by %c7_i32_43 dim 0 : vector<8x128xf32>, i32 -> vector<8x128xf32>
    %c1_i32_44 = arith.constant 1 : i32
    %95 = tpu.dynamic_rotate %93 by %c1_i32_44 dim 0 : vector<8x128xf32>, i32 -> vector<8x128xf32>
    %96 = arith.minimumf %93, %94 : vector<8x128xf32>
    %97 = arith.maximumf %93, %95 : vector<8x128xf32>
    %98 = arith.select %63, %97, %93 : vector<8x128xi1>, vector<8x128xf32>
    %99 = arith.select %49, %96, %98 : vector<8x128xi1>, vector<8x128xf32>
    %c7_i32_45 = arith.constant 7 : i32
    %100 = tpu.dynamic_rotate %99 by %c7_i32_45 dim 0 : vector<8x128xf32>, i32 -> vector<8x128xf32>
    %c1_i32_46 = arith.constant 1 : i32
    %101 = tpu.dynamic_rotate %99 by %c1_i32_46 dim 0 : vector<8x128xf32>, i32 -> vector<8x128xf32>
    %102 = arith.minimumf %99, %100 : vector<8x128xf32>
    %103 = arith.maximumf %99, %101 : vector<8x128xf32>
    %104 = arith.select %56, %103, %99 : vector<8x128xi1>, vector<8x128xf32>
    %105 = arith.select %42, %102, %104 : vector<8x128xi1>, vector<8x128xf32>
    %c7_i32_47 = arith.constant 7 : i32
    %106 = tpu.dynamic_rotate %105 by %c7_i32_47 dim 0 : vector<8x128xf32>, i32 -> vector<8x128xf32>
    %c1_i32_48 = arith.constant 1 : i32
    %107 = tpu.dynamic_rotate %105 by %c1_i32_48 dim 0 : vector<8x128xf32>, i32 -> vector<8x128xf32>
    %108 = arith.minimumf %105, %106 : vector<8x128xf32>
    %109 = arith.maximumf %105, %107 : vector<8x128xf32>
    %110 = arith.select %63, %109, %105 : vector<8x128xi1>, vector<8x128xf32>
    %111 = arith.select %49, %108, %110 : vector<8x128xi1>, vector<8x128xf32>
    %c0_49 = arith.constant 0 : index
    %c0_50 = arith.constant 0 : index
    %112 = vector.load %arg8[%c0_49, %c0_50] : memref<8x128xf32, #tpu.memory_space<vmem>>, vector<8x128xf32>
    tpu.vector_store %arg8[%c0_49, %c0_50], %111 {strides = array<i32>} : memref<8x128xf32, #tpu.memory_space<vmem>>, vector<8x128xf32>,
    return
  }
}

</mosaic_0001>

<llo_original>
// kernel: tpu_custom_call.1
$region0: #{tpu_custom_call.1}
  #allocation0 [shape = 'u32[]', space=smem, size = 0x4, offset = 0x4, fixed_abs, tag = 'smem constant byte address 0x4 - core index']
  #allocation1 [shape = 'u32[144,128]{1,0:T(1,128)}', space=vmem, size = 0x12000, scoped, tag = 'internal scratch']
  %s0 = inlined_call_operand.vmem [shape: f32[4,1], index: 0, kind: input, shape index: {}]
  %s1 = inlined_call_operand.vmem [shape: f32[8,3], index: 1, kind: input, shape index: {}]
  %s2 = inlined_call_operand.vmem [shape: f32[8,1], index: 2, kind: input, shape index: {}]
  %s3 = inlined_call_operand.vmem [shape: f32[4,32], index: 3, kind: input, shape index: {}]
  %s4 = inlined_call_operand.vmem [shape: f32[3,32], index: 4, kind: input, shape index: {}]
  %s5 = inlined_call_operand.vmem [shape: f32[1,32], index: 5, kind: input, shape index: {}]
  %s6 = inlined_call_operand.vmem [shape: f32[32,128], index: 6, kind: input, shape index: {}]
  %s7 = inlined_call_operand.vmem [shape: f32[1,128], index: 7, kind: input, shape index: {}]
  %s8 = inlined_call_operand.hbm [shape: f32[8,128], index: 8, kind: output, shape index: {}]
  %s9 = sld [smem:[#allocation0]]
  $region42: #{tpu_custom_call.1} parent=0
    _
  %s11 = ssub.s32 1, %s9
  %s12 = scalar_select 0, %s11, %s9
  $region1: #{tpu_custom_call.1} parent=0
    #allocation2 [shape = 'u8[4096]{0}', space=vmem, size = 0x1000, scoped, tag = 'output window, operand 0, single buffered']
    #allocation3 [shape = 's32[1]{0}', space=sflag, size = 0x4, scoped, tag = 'scoped memory for tpu_custom_call.1']
    %13 = vsyncpa [#allocation3], 0
    // Predicated region
    $region2: #{tpu_custom_call.1} parent=1 // pred_check
      _
    $region3: #{tpu_custom_call.1} parent=1 // pred_check_branch
      %15 = sbr.rel (0) target = $region5
    $region4: #{tpu_custom_call.1} parent=1 // pred_region
      _
    $region5: #{tpu_custom_call.1} parent=1 // pred_fallthru
      _
    // Predicated region
    $region6: #{tpu_custom_call.1} parent=1 // pred_check
      _
    $region7: #{tpu_custom_call.1} parent=1 // pred_check_branch
      %17 = sbr.rel (0) target = $region9
    $region8: #{tpu_custom_call.1} parent=1 // pred_region
      _
    $region9: #{tpu_custom_call.1} parent=1 // pred_fallthru
      _
    // Predicated region
    $region10: #{tpu_custom_call.1} parent=1 // pred_check
      _
    $region11: #{tpu_custom_call.1} parent=1 // pred_check_branch
      %19 = sbr.rel (0) target = $region13
    $region12: #{tpu_custom_call.1} parent=1 // pred_region
      _
    $region13: #{tpu_custom_call.1} parent=1 // pred_fallthru
      _
    // Predicated region
    $region14: #{tpu_custom_call.1} parent=1 // pred_check
      _
    $region15: #{tpu_custom_call.1} parent=1 // pred_check_branch
      %21 = sbr.rel (0) target = $region17
    $region16: #{tpu_custom_call.1} parent=1 // pred_region
      _
    $region17: #{tpu_custom_call.1} parent=1 // pred_fallthru
      _
    // Predicated region
    $region18: #{tpu_custom_call.1} parent=1 // pred_check
      _
    $region19: #{tpu_custom_call.1} parent=1 // pred_check_branch
      %23 = sbr.rel (0) target = $region21
    $region20: #{tpu_custom_call.1} parent=1 // pred_region
      _
    $region21: #{tpu_custom_call.1} parent=1 // pred_fallthru
      _
    // Predicated region
    $region22: #{tpu_custom_call.1} parent=1 // pred_check
      _
    $region23: #{tpu_custom_call.1} parent=1 // pred_check_branch
      %25 = sbr.rel (0) target = $region25
    $region24: #{tpu_custom_call.1} parent=1 // pred_region
      _
    $region25: #{tpu_custom_call.1} parent=1 // pred_fallthru
      _
    // Predicated region
    $region26: #{tpu_custom_call.1} parent=1 // pred_check
      _
    $region27: #{tpu_custom_call.1} parent=1 // pred_check_branch
      %27 = sbr.rel (0) target = $region29
    $region28: #{tpu_custom_call.1} parent=1 // pred_region
      _
    $region29: #{tpu_custom_call.1} parent=1 // pred_fallthru
      _
    // Predicated region
    $region30: #{tpu_custom_call.1} parent=1 // pred_check
      _
    $region31: #{tpu_custom_call.1} parent=1 // pred_check_branch
      %29 = sbr.rel (0) target = $region33
    $region32: #{tpu_custom_call.1} parent=1 // pred_region
      _
    $region33: #{tpu_custom_call.1} parent=1 // pred_fallthru
      _
    %v30 = vld [vmem:[%s1] sm:$0xff]
    %v31 = vmax.f32 %v30, 0.0
    %v32 = vmin.f32 %v31, 1.0
    %v33 = vld [vmem:[%s2] sm:$0xff]
    %v34 = vmax.f32 %v33, 0.0
    %v35 = vmin.f32 %v34, 10.0
    %v36 = vld [vmem:[%s0] sm:$0xf]
    %v37 = vmax.f32 %v36, 0.0
    %v38 = vmin.f32 %v37, 1.0
    %v39 = vld [vmem:[%s3] sm:$0xf]
    %41 = vset.pattern.permute.xlu0 0
    %42 = vperm.xlu0 %41, %v38
    %v43 = vpop.permute.xlu0 %42
    %v45 = vmul.f32 %v39, %v43
    %vm46 = vcmask 257024
    %v47 = vsel %vm46, %v45, 0.0
    %v48 = vrot.slane %v47, 4
    %v49 = vadd.f32 %v47, %v48
    %v50 = vrot.slane %v49, 2
    %v51 = vadd.f32 %v49, %v50
    %v52 = vrot.slane %v51, 1
    %v53 = vadd.f32 %v51, %v52
    %v54 = vld [vmem:[%s5] sm:$0x1]
    %v55 = vadd.f32 %v53, %v54
    %v56 = vld [vmem:[%s4] sm:$0x7]
    %v57 = vlaneseq
    %v58 = vshrl.u32 %v57, 7
    %v59 = vsub.s32 0, %v58
    %v60 = vrot.slane %v55, %v59
    %vm61 = vcmask 23552
    %v63 = vsel %vm61, %v32, 0
    %vm65 = vcmask 1042432
    %v67 = vsel %vm65, %v56, 0
    %69 = vmatprep.subr.mxu0 0.0
    %70 = vmatpush1.msra.mxu0 %v67
    %71 = vmatprep.subr.mxu0 0.0
    %72 = vmatpush1.msra.mxu0 0.0
    %73 = vmatprep.subr.mxu0 0.0
    %74 = vmatpush1.msra.mxu0 0.0
    %75 = vmatprep.subr.mxu0 0.0
    %76 = vmatpush1.msra.mxu0 0.0
    %77 = vmatprep.subr.mxu0 0.0
    %78 = vmatpush1.msra.mxu0 0.0
    %79 = vmatprep.subr.mxu0 0.0
    %80 = vmatpush1.msra.mxu0 0.0
    %81 = vmatprep.subr.mxu0 0.0
    %82 = vmatpush1.msra.mxu0 0.0
    %83 = vmatprep.subr.mxu0 0.0
    %84 = vmatpush1.msra.mxu0 0.0
    %85 = vmatprep.subr.mxu0 0.0
    %86 = vmatpush1.msra.mxu0 0.0
    %87 = vmatprep.subr.mxu0 0.0
    %88 = vmatpush1.msra.mxu0 0.0
    %89 = vmatprep.subr.mxu0 0.0
    %90 = vmatpush1.msra.mxu0 0.0
    %91 = vmatprep.subr.mxu0 0.0
    %92 = vmatpush1.msra.mxu0 0.0
    %93 = vmatprep.subr.mxu0 0.0
    %94 = vmatpush1.msra.mxu0 0.0
    %95 = vmatprep.subr.mxu0 0.0
    %96 = vmatpush1.msra.mxu0 0.0
    %97 = vmatprep.subr.mxu0 0.0
    %98 = vmatpush1.msra.mxu0 0.0
    %99 = vmatprep.subr.mxu0 0.0
    %100 = vmatpush1.msra.mxu0 0.0
    %101 = vmatprep.subr.mxu0 0.0
    %102 = vmatpush1.msra.mxu0 0.0
    %103 = vmatprep.subr.mxu0 0.0
    %104 = vmatpush1.msra.mxu0 0.0
    %105 = vmatprep.subr.mxu0 0.0
    %106 = vmatpush1.msra.mxu0 0.0
    %107 = vmatprep.subr.mxu0 0.0
    %108 = vmatpush1.msra.mxu0 0.0
    %109 = vmatprep.subr.mxu0 0.0
    %110 = vmatpush1.msra.mxu0 0.0
    %111 = vmatprep.subr.mxu0 0.0
    %112 = vmatpush1.msra.mxu0 0.0
    %113 = vmatprep.subr.mxu0 0.0
    %114 = vmatpush1.msra.mxu0 0.0
    %115 = vmatprep.subr.mxu0 0.0
    %116 = vmatpush1.msra.mxu0 0.0
    %117 = vmatprep.subr.mxu0 0.0
    %118 = vmatpush1.msra.mxu0 0.0
    %119 = vmatprep.subr.mxu0 0.0
    %120 = vmatpush1.msra.mxu0 0.0
    %121 = vmatprep.subr.mxu0 0.0
    %122 = vmatpush1.msra.mxu0 0.0
    %123 = vmatprep.subr.mxu0 0.0
    %124 = vmatpush1.msra.mxu0 0.0
    %125 = vmatprep.subr.mxu0 0.0
    %126 = vmatpush1.msra.mxu0 0.0
    %127 = vmatprep.subr.mxu0 0.0
    %128 = vmatpush1.msra.mxu0 0.0
    %129 = vmatprep.subr.mxu0 0.0
    %130 = vmatpush1.msra.mxu0 0.0
    %131 = vmatprep.subr.mxu0 0.0
    %132 = vmatpush1.msra.mxu0 0.0
    %133 = vmatprep.mubr.f32.mxu0 0.0
    %134 = vmatmul.mubr.f32.gmra.mrb[0].mxu0 %v63
    %v135 = vpop.f32.mrb[0].mxu0
    %v136 = vadd.f32 %v60, %v135
    %v137 = vpop.f32.mrb[0].mxu0
    %138 = vdwg.mxu0
    %v139 = vmax.f32 %v136, 0.0
    %v140 = vld [vmem:[%s6] sm:$0xff]
    %v141 = vld [vmem:[%s6 + $0x8] sm:$0xff]
    %v142 = vld [vmem:[%s6 + $0x10] sm:$0xff]
    %v143 = vld [vmem:[%s6 + $0x18] sm:$0xff]
    %v144 = vld [vmem:[%s7] sm:$0x1]
    %146 = vset.pattern.permute.xlu0 0
    %147 = vperm.xlu0 %146, %v35
    %v148 = vpop.permute.xlu0 %147
    %v151 = vlaneseq
    %v152 = vshrl.u32 %v151, 7
    %v153 = vsub.s32 0, %v152
    %v154 = vrot.slane %v144, %v153
    %v156 = vadd.f32 %v148, %v154
    %vm157 = vcmask 261120
    %v159 = vsel %vm157, %v139, 0
    %161 = vmatprep.subr.mxu0 0.0
    %162 = vmatpush1.msra.mxu0 %v140
    %163 = vmatprep.subr.mxu0 0.0
    %164 = vmatpush1.msra.mxu0 %v141
    %165 = vmatprep.subr.mxu0 0.0
    %166 = vmatpush1.msra.mxu0 %v142
    %167 = vmatprep.subr.mxu0 0.0
    %168 = vmatpush1.msra.mxu0 %v143
    %169 = vmatprep.subr.mxu0 0.0
    %170 = vmatpush1.msra.mxu0 0.0
    %171 = vmatprep.subr.mxu0 0.0
    %172 = vmatpush1.msra.mxu0 0.0
    %173 = vmatprep.subr.mxu0 0.0
    %174 = vmatpush1.msra.mxu0 0.0
    %175 = vmatprep.subr.mxu0 0.0
    %176 = vmatpush1.msra.mxu0 0.0
    %177 = vmatprep.subr.mxu0 0.0
    %178 = vmatpush1.msra.mxu0 0.0
    %179 = vmatprep.subr.mxu0 0.0
    %180 = vmatpush1.msra.mxu0 0.0
    %181 = vmatprep.subr.mxu0 0.0
    %182 = vmatpush1.msra.mxu0 0.0
    %183 = vmatprep.subr.mxu0 0.0
    %184 = vmatpush1.msra.mxu0 0.0
    %185 = vmatprep.subr.mxu0 0.0
    %186 = vmatpush1.msra.mxu0 0.0
    %187 = vmatprep.subr.mxu0 0.0
    %188 = vmatpush1.msra.mxu0 0.0
    %189 = vmatprep.subr.mxu0 0.0
    %190 = vmatpush1.msra.mxu0 0.0
    %191 = vmatprep.subr.mxu0 0.0
    %192 = vmatpush1.msra.mxu0 0.0
    %193 = vmatprep.subr.mxu0 0.0
    %194 = vmatpush1.msra.mxu0 0.0
    %195 = vmatprep.subr.mxu0 0.0
    %196 = vmatpush1.msra.mxu0 0.0
    %197 = vmatprep.subr.mxu0 0.0
    %198 = vmatpush1.msra.mxu0 0.0
    %199 = vmatprep.subr.mxu0 0.0
    %200 = vmatpush1.msra.mxu0 0.0
    %201 = vmatprep.subr.mxu0 0.0
    %202 = vmatpush1.msra.mxu0 0.0
    %203 = vmatprep.subr.mxu0 0.0
    %204 = vmatpush1.msra.mxu0 0.0
    %205 = vmatprep.subr.mxu0 0.0
    %206 = vmatpush1.msra.mxu0 0.0
    %207 = vmatprep.subr.mxu0 0.0
    %208 = vmatpush1.msra.mxu0 0.0
    %209 = vmatprep.subr.mxu0 0.0
    %210 = vmatpush1.msra.mxu0 0.0
    %211 = vmatprep.subr.mxu0 0.0
    %212 = vmatpush1.msra.mxu0 0.0
    %213 = vmatprep.subr.mxu0 0.0
    %214 = vmatpush1.msra.mxu0 0.0
    %215 = vmatprep.subr.mxu0 0.0
    %216 = vmatpush1.msra.mxu0 0.0
    %217 = vmatprep.subr.mxu0 0.0
    %218 = vmatpush1.msra.mxu0 0.0
    %219 = vmatprep.subr.mxu0 0.0
    %220 = vmatpush1.msra.mxu0 0.0
    %221 = vmatprep.subr.mxu0 0.0
    %222 = vmatpush1.msra.mxu0 0.0
    %223 = vmatprep.subr.mxu0 0.0
    %224 = vmatpush1.msra.mxu0 0.0
    %225 = vmatprep.mubr.f32.mxu0 0.0
    %226 = vmatmul.mubr.f32.gmra.mrb[0].mxu0 %v159
    %v227 = vpop.f32.mrb[0].mxu0
    %v228 = vadd.f32 %v156, %v227
    %v229 = vpop.f32.mrb[0].mxu0
    %230 = vdwg.mxu0
    %v231 = vlaneseq
    %v232 = vshrl.u32 %v231, 7
    %v233 = vand.u32 %v232, 1
    %vm234 = vcmp.eq.s32.totalorder %v233, 0
    %vm235 = vcmp.lt.s32.totalorder %v232, 7
    %vm236 = vmand %vm234, %vm235
    %vm237 = vcmp.eq.s32.totalorder %v233, 1
    %vm238 = vmand %vm237, %vm235
    %vm239 = vcmp.ge.s32.totalorder %v232, 1
    %vm240 = vmand %vm237, %vm239
    %vm241 = vmand %vm234, %vm239
    %v242 = vrot.slane %v228, 1
    %v243 = vrot.slane %v228, 7
    %v244 = vmin.f32 %v228, %v242
    %v245 = vmax.f32 %v228, %v243
    %v246 = vsel %vm240, %v245, %v228
    %v247 = vsel %vm236, %v244, %v246
    %v248 = vrot.slane %v247, 1
    %v249 = vrot.slane %v247, 7
    %v250 = vmin.f32 %v247, %v248
    %v251 = vmax.f32 %v247, %v249
    %v252 = vsel %vm241, %v251, %v247
    %v253 = vsel %vm238, %v250, %v252
    %v254 = vrot.slane %v253, 1
    %v255 = vrot.slane %v253, 7
    %v256 = vmin.f32 %v253, %v254
    %v257 = vmax.f32 %v253, %v255
    %v258 = vsel %vm240, %v257, %v253
    %v259 = vsel %vm236, %v256, %v258
    %v260 = vrot.slane %v259, 1
    %v261 = vrot.slane %v259, 7
    %v262 = vmin.f32 %v259, %v260
    %v263 = vmax.f32 %v259, %v261
    %v264 = vsel %vm241, %v263, %v259
    %v265 = vsel %vm238, %v262, %v264
    %v266 = vrot.slane %v265, 1
    %v267 = vrot.slane %v265, 7
    %v268 = vmin.f32 %v265, %v266
    %v269 = vmax.f32 %v265, %v267
    %v270 = vsel %vm240, %v269, %v265
    %v271 = vsel %vm236, %v268, %v270
    %v272 = vrot.slane %v271, 1
    %v273 = vrot.slane %v271, 7
    %v274 = vmin.f32 %v271, %v272
    %v275 = vmax.f32 %v271, %v273
    %v276 = vsel %vm241, %v275, %v271
    %v277 = vsel %vm238, %v274, %v276
    %v278 = vrot.slane %v277, 1
    %v279 = vrot.slane %v277, 7
    %v280 = vmin.f32 %v277, %v278
    %v281 = vmax.f32 %v277, %v279
    %v282 = vsel %vm240, %v281, %v277
    %v283 = vsel %vm236, %v280, %v282
    %v284 = vrot.slane %v283, 1
    %v285 = vrot.slane %v283, 7
    %v286 = vmin.f32 %v283, %v284
    %v287 = vmax.f32 %v283, %v285
    %v288 = vsel %vm241, %v287, %v283
    %v289 = vsel %vm238, %v286, %v288
    %290 = vst [vmem:[#allocation2] sm:$0xff] %v289
    // Predicated region
    $region34: #{tpu_custom_call.1} parent=1 // pred_check
      _
    $region35: #{tpu_custom_call.1} parent=1 // pred_check_branch
      %292 = sbr.rel (0) target = $region37
    $region36: #{tpu_custom_call.1} parent=1 // pred_region
      %s294 = ssub.s32 128, 128
      %295 = vsyncadd [#allocation3], %s294
      %s297 = sshll.u32 [#allocation2], 4
      %s298 = int_to_ptr.vmem [resolvable:$true] %s297
      %300 = dma.vmem_to_hbm [thread:$0]  %s298, 128, %s8, [#allocation3]
    $region37: #{tpu_custom_call.1} parent=1 // pred_fallthru
      _
    // Predicated region
    $region38: #{tpu_custom_call.1} parent=1 // pred_check
      _
    $region39: #{tpu_custom_call.1} parent=1 // pred_check_branch
      %302 = sbr.rel (0) target = $region41
    $region40: #{tpu_custom_call.1} parent=1 // pred_region
      %303 = dma.done [#allocation3], 128
    $region41: #{tpu_custom_call.1} parent=1 // pred_fallthru
      _
    %304 = vsyncpa [#allocation3], 1

</llo_original>
